<compile_context>
chip_gen: v6e
topology: v6e:2x2x1
jax: 0.10.0
libtpu: 0.0.40
codegen_flags: <defaults>
</compile_context>

<pallas_src>
import math

import jax
import jax.numpy as jnp
from jax.experimental import pallas as pl
from jax.experimental.pallas import tpu as pltpu


def attention_kernel(q_ref, k_ref, v_ref, wqT_ref, wkT_ref, b_ref, o_ref):
    """Whole-problem kernel (no grid); every ref is a full array in VMEM.

    q_ref, k_ref, v_ref : (B, ni)   row layout (features on the lane axis)
    wqT_ref, wkT_ref    : (ni, ni)  weights pre-transposed to (in, out)
    b_ref               : (2, ni)   row 0 = query bias, row 1 = key bias
    o_ref               : (B, ni)   output, row layout
    """
    q = q_ref[...]
    k = k_ref[...]
    v = v_ref[...]

    # Batched linear projections (torch Linear: y = x @ W.T + b):
    # one MXU matmul each for the whole batch.
    qp = jnp.dot(q, wqT_ref[...],
                 preferred_element_type=jnp.float32) + b_ref[0:1, :]   # (B, ni)
    kp = jnp.dot(k, wkT_ref[...],
                 preferred_element_type=jnp.float32) + b_ref[1:2, :]   # (B, ni)

    # Transposed scores for the whole batch at once:
    #   sT[b, j, i] = Kp[b, j] * Qp[b, i]
    # so the softmax normalization axis (i, torch dim 1) is the lane axis.
    sT = kp[:, :, None] * qp[:, None, :]                  # (B, ni, ni)

    # Numerically-stable softmax over i (last axis).
    sT = sT - jnp.max(sT, axis=-1, keepdims=True)
    e = jnp.exp(sT)
    denom = jnp.sum(e, axis=-1, keepdims=True)            # (B, ni, 1)
    inv = pl.reciprocal(denom, approx=False)              # exact: keeps 1e-5 tol
    maskT = e * inv                                       # (B, ni, ni)

    # out[b, i] = sum_j maskT[b, j, i] * v[b, j]   (raw v, matching torch).
    out = jnp.sum(maskT * v[:, :, None], axis=1)          # (B, ni)

    # Single lane-dense full-tile store.
    o_ref[...] = out.astype(o_ref.dtype)

    # TODO(synk): negate=True branch (F.normalize(1 - mask, p=1) over dim 1)
    # is not implemented; only the default negate=False path is kernelized.


def attention_forward(k, v, q, wq, bq, wk, bk):
    """JAX wrapper reproducing Attention.forward(k, v, q, negate=False)."""
    # Mimic `reshape`: promote 1-D inputs to (1, ni).
    k, v, q = [x[None, :] if x.ndim == 1 else x for x in (k, v, q)]
    B, ni = q.shape

    # One-time parameter prep (not on the activation data path):
    # pre-transpose weights to (in, out) so the kernel is transpose-free, and
    # pack both biases into a single (2, ni) side input (one DMA instead of 2).
    wqT = wq.T
    wkT = wk.T
    b2 = jnp.stack([bq, bk], axis=0)                      # (2, ni)

    vmem_spec = pl.BlockSpec(memory_space=pltpu.MemorySpace.VMEM)

    out = pl.pallas_call(
        attention_kernel,
        out_shape=jax.ShapeDtypeStruct((B, ni), jnp.float32),
        in_specs=[vmem_spec] * 6,          # whole arrays resident in VMEM
        out_specs=vmem_spec,
    )(q, k, v, wqT, wkT, b2)

    return jnp.squeeze(out)                # mimic torch .squeeze()


def attention_ref(k, v, q, wq, bq, wk, bk):
    """Pure-JAX reference of the PyTorch forward (negate=False)."""
    k, v, q = [x[None, :] if x.ndim == 1 else x for x in (k, v, q)]
    Q = q @ wq.T + bq                                     # (B, ni)
    K = k @ wk.T + bk                                     # (B, ni)
    s = Q[:, :, None] * K[:, None, :]                     # (B, ni, ni)
    mask = jax.nn.softmax(s, axis=1)                      # softmax over dim 1
    out = jnp.einsum("bij,bj->bi", mask, v)
    return jnp.squeeze(out)


if __name__ == "__main__":
    B, NI = 2, 32
    key = jax.random.PRNGKey(0)
    ks = jax.random.split(key, 9)
    bound = 1.0 / math.sqrt(NI)

    # Deterministic parameter init mirroring nn.Linear(ni, ni) defaults.
    wq = jax.random.uniform(ks[0], (NI, NI), jnp.float32, -bound, bound)
    bq = jax.random.uniform(ks[1], (NI,), jnp.float32, -bound, bound)
    wk = jax.random.uniform(ks[2], (NI, NI), jnp.float32, -bound, bound)
    bk = jax.random.uniform(ks[3], (NI,), jnp.float32, -bound, bound)
    # `self.value` is declared in the module but never used in forward; create
    # it for parity and do not use it.
    wv = jax.random.uniform(ks[4], (NI, NI), jnp.float32, -bound, bound)
    bv = jax.random.uniform(ks[5], (NI,), jnp.float32, -bound, bound)
    del wv, bv

    k_in = jax.random.normal(ks[6], (B, NI), jnp.float32)
    v_in = jax.random.normal(ks[7], (B, NI), jnp.float32)
    q_in = jax.random.normal(ks[8], (B, NI), jnp.float32)

    out = attention_forward(k_in, v_in, q_in, wq, bq, wk, bk)
    out = jax.block_until_ready(out)

    ref = attention_ref(k_in, v_in, q_in, wq, bq, wk, bk)
    assert out.shape == ref.shape == (B, NI), (out.shape, ref.shape)
    assert jnp.allclose(out, ref, atol=1e-5, rtol=1e-5), (
        float(jnp.max(jnp.abs(out - ref))))

    print("KERNEL_OK")
</pallas_src>

<mosaic_0001>
module attributes {stable_mosaic.version = 11 : i64} {
  func.func @attention_kernel(%arg0: memref<2x32xf32, #tpu.memory_space<vmem>>, %arg1: memref<2x32xf32, #tpu.memory_space<vmem>>, %arg2: memref<2x32xf32, #tpu.memory_space<vmem>>, %arg3: memref<32x32xf32, #tpu.memory_space<vmem>>, %arg4: memref<32x32xf32, #tpu.memory_space<vmem>>, %arg5: memref<2x32xf32, #tpu.memory_space<vmem>>, %arg6: memref<2x32xf32, #tpu.memory_space<vmem>>) attributes {dimension_semantics = [], scalar_prefetch = 0 : i64, scratch_operands = 0 : i64, tpu.core_type = #tpu.core_type<tc>} {
    %c0 = arith.constant 0 : index
    %c0_0 = arith.constant 0 : index
    %0 = vector.load %arg0[%c0, %c0_0] : memref<2x32xf32, #tpu.memory_space<vmem>>, vector<2x32xf32>
    %c0_1 = arith.constant 0 : index
    %c0_2 = arith.constant 0 : index
    %1 = vector.load %arg1[%c0_1, %c0_2] : memref<2x32xf32, #tpu.memory_space<vmem>>, vector<2x32xf32>
    %c0_3 = arith.constant 0 : index
    %c0_4 = arith.constant 0 : index
    %2 = vector.load %arg2[%c0_3, %c0_4] : memref<2x32xf32, #tpu.memory_space<vmem>>, vector<2x32xf32>
    %c0_5 = arith.constant 0 : index
    %c0_6 = arith.constant 0 : index
    %3 = vector.load %arg3[%c0_5, %c0_6] : memref<32x32xf32, #tpu.memory_space<vmem>>, vector<32x32xf32>
    %cst = arith.constant dense<0.000000e+00> : vector<2x32xf32>
    %4 = tpu.matmul %0, %3, %cst {dimension_numbers = #tpu.dot_dimension_numbers<[1], [0], [0], [1], [0, 0, 1, 1], [], []>} : vector<2x32xf32>, vector<32x32xf32>, vector<2x32xf32> -> vector<2x32xf32>
    %c0_7 = arith.constant 0 : index
    %c0_8 = arith.constant 0 : index
    %5 = vector.load %arg5[%c0_7, %c0_8] : memref<2x32xf32, #tpu.memory_space<vmem>>, vector<1x32xf32>
    %6 = vector.broadcast %5 : vector<1x32xf32> to vector<2x32xf32>
    %7 = arith.addf %4, %6 : vector<2x32xf32>
    %c0_9 = arith.constant 0 : index
    %c0_10 = arith.constant 0 : index
    %8 = vector.load %arg4[%c0_9, %c0_10] : memref<32x32xf32, #tpu.memory_space<vmem>>, vector<32x32xf32>
    %cst_11 = arith.constant dense<0.000000e+00> : vector<2x32xf32>
    %9 = tpu.matmul %1, %8, %cst_11 {dimension_numbers = #tpu.dot_dimension_numbers<[1], [0], [0], [1], [0, 0, 1, 1], [], []>} : vector<2x32xf32>, vector<32x32xf32>, vector<2x32xf32> -> vector<2x32xf32>
    %c1 = arith.constant 1 : index
    %c0_12 = arith.constant 0 : index
    %10 = vector.load %arg5[%c1, %c0_12] : memref<2x32xf32, #tpu.memory_space<vmem>>, vector<1x32xf32>
    %11 = vector.broadcast %10 : vector<1x32xf32> to vector<2x32xf32>
    %12 = arith.addf %9, %11 : vector<2x32xf32>
    %13 = vector.shape_cast %12 : vector<2x32xf32> to vector<2x32x1xf32>
    %14 = vector.shape_cast %7 : vector<2x32xf32> to vector<2x1x32xf32>
    %15 = vector.broadcast %13 : vector<2x32x1xf32> to vector<2x32x32xf32>
    %16 = vector.broadcast %14 : vector<2x1x32xf32> to vector<2x32x32xf32>
    %17 = arith.mulf %15, %16 : vector<2x32x32xf32>
    %cst_13 = arith.constant dense<0xFF800000> : vector<2x32xf32>
    %18 = vector.multi_reduction <maximumf>, %17, %cst_13 [2] : vector<2x32x32xf32> to vector<2x32xf32>
    %19 = vector.shape_cast %18 : vector<2x32xf32> to vector<2x32x1xf32>
    %20 = vector.broadcast %19 : vector<2x32x1xf32> to vector<2x32x32xf32>
    %21 = arith.subf %17, %20 : vector<2x32x32xf32>
    %22 = math.exp %21 : vector<2x32x32xf32>
    %cst_14 = arith.constant dense<0.000000e+00> : vector<2x32xf32>
    %23 = vector.multi_reduction <add>, %22, %cst_14 [2] : vector<2x32x32xf32> to vector<2x32xf32>
    %24 = vector.shape_cast %23 : vector<2x32xf32> to vector<2x32x1xf32>
    %25 = tpu.reciprocal %24 : vector<2x32x1xf32> -> vector<2x32x1xf32>
    %26 = vector.broadcast %25 : vector<2x32x1xf32> to vector<2x32x32xf32>
    %27 = arith.mulf %22, %26 : vector<2x32x32xf32>
    %28 = vector.shape_cast %2 : vector<2x32xf32> to vector<2x32x1xf32>
    %29 = vector.broadcast %28 : vector<2x32x1xf32> to vector<2x32x32xf32>
    %30 = arith.mulf %27, %29 : vector<2x32x32xf32>
    %cst_15 = arith.constant dense<0.000000e+00> : vector<2x32xf32>
    %31 = vector.multi_reduction <add>, %30, %cst_15 [1] : vector<2x32x32xf32> to vector<2x32xf32>
    %c0_16 = arith.constant 0 : index
    %c0_17 = arith.constant 0 : index
    %32 = vector.load %arg6[%c0_16, %c0_17] : memref<2x32xf32, #tpu.memory_space<vmem>>, vector<2x32xf32>
    tpu.vector_store %arg6[%c0_16, %c0_17], %31 {strides = array<i32>} : memref<2x32xf32, #tpu.memory_space<vmem>>, vector<2x32xf32>,
    return
  }
}

</mosaic_0001>

<llo_original>
// kernel: tpu_custom_call.1
$region0: #{tpu_custom_call.1}
  #allocation0 [shape = 'u32[]', space=smem, size = 0x4, offset = 0x4, fixed_abs, tag = 'smem constant byte address 0x4 - core index']
  #allocation1 [shape = 'u32[144,128]{1,0:T(1,128)}', space=vmem, size = 0x12000, scoped, tag = 'internal scratch']
  %s0 = inlined_call_operand.hbm [shape: f32[2,32], index: 0, kind: input, shape index: {}]
  %s1 = inlined_call_operand.hbm [shape: f32[2,32], index: 1, kind: input, shape index: {}]
  %s2 = inlined_call_operand.vmem [shape: f32[2,32], index: 2, kind: input, shape index: {}]
  %s3 = inlined_call_operand.hbm [shape: f32[32,32], index: 3, kind: input, shape index: {}]
  %s4 = inlined_call_operand.hbm [shape: f32[32,32], index: 4, kind: input, shape index: {}]
  %s5 = inlined_call_operand.vmem [shape: f32[2,32], index: 5, kind: input, shape index: {}]
  %s6 = inlined_call_operand.hbm [shape: f32[2,32], index: 6, kind: output, shape index: {}]
  %s7 = sld [smem:[#allocation0]]
  $region50: #{tpu_custom_call.1} parent=0
    _
  %s9 = ssub.s32 1, %s7
  %s10 = scalar_select 0, %s9, %s7
  $region1: #{tpu_custom_call.1} parent=0
    #allocation2 [shape = 'u8[1024]{0}', space=vmem, size = 0x400, scoped, tag = 'input window, operand 0, single buffered']
    #allocation3 [shape = 's32[1]{0}', space=sflag, size = 0x4, scoped, tag = 'scoped memory for tpu_custom_call.1']
    #allocation4 [shape = 's32[1]{0}', space=sflag, size = 0x4, scoped, tag = 'scoped memory for tpu_custom_call.1']
    #allocation5 [shape = 'u8[1024]{0}', space=vmem, size = 0x400, scoped, tag = 'input window, operand 1, single buffered']
    #allocation6 [shape = 's32[1]{0}', space=sflag, size = 0x4, scoped, tag = 'scoped memory for tpu_custom_call.1']
    #allocation7 [shape = 'u8[16384]{0}', space=vmem, size = 0x4000, scoped, tag = 'input window, operand 3, single buffered']
    #allocation8 [shape = 'u8[16384]{0}', space=vmem, size = 0x4000, scoped, tag = 'input window, operand 4, single buffered']
    #allocation9 [shape = 's32[1]{0}', space=sflag, size = 0x4, scoped, tag = 'scoped memory for tpu_custom_call.1']
    #allocation10 [shape = 'u8[1024]{0}', space=vmem, size = 0x400, scoped, tag = 'output window, operand 0, single buffered']
    %11 = vsyncpa [#allocation3], 0
    %12 = vsyncpa [#allocation6], 0
    %13 = vsyncpa [#allocation9], 0
    %14 = vsyncpa [#allocation4], 0
    // Predicated region
    $region2: #{tpu_custom_call.1} parent=1 // pred_check
      _
    $region3: #{tpu_custom_call.1} parent=1 // pred_check_branch
      %16 = sbr.rel (0) target = $region5
    $region4: #{tpu_custom_call.1} parent=1 // pred_region
      %s18 = ssub.s32 32, 32
      %19 = vsyncadd [#allocation3], %s18
      %s21 = sshll.u32 [#allocation2], 4
      %s22 = int_to_ptr.vmem [resolvable:$true] %s21
      %24 = dma.hbm_to_vmem [thread:$0]  %s0, 32, %s22, [#allocation3]
    $region5: #{tpu_custom_call.1} parent=1 // pred_fallthru
      _
    // Predicated region
    $region6: #{tpu_custom_call.1} parent=1 // pred_check
      _
    $region7: #{tpu_custom_call.1} parent=1 // pred_check_branch
      %26 = sbr.rel (0) target = $region9
    $region8: #{tpu_custom_call.1} parent=1 // pred_region
      %s28 = ssub.s32 32, 32
      %29 = vsyncadd [#allocation6], %s28
      %s31 = sshll.u32 [#allocation5], 4
      %s32 = int_to_ptr.vmem [resolvable:$true] %s31
      %34 = dma.hbm_to_vmem [thread:$0]  %s1, 32, %s32, [#allocation6]
    $region9: #{tpu_custom_call.1} parent=1 // pred_fallthru
      _
    // Predicated region
    $region10: #{tpu_custom_call.1} parent=1 // pred_check
      _
    $region11: #{tpu_custom_call.1} parent=1 // pred_check_branch
      %36 = sbr.rel (0) target = $region13
    $region12: #{tpu_custom_call.1} parent=1 // pred_region
      _
    $region13: #{tpu_custom_call.1} parent=1 // pred_fallthru
      _
    // Predicated region
    $region14: #{tpu_custom_call.1} parent=1 // pred_check
      _
    $region15: #{tpu_custom_call.1} parent=1 // pred_check_branch
      %38 = sbr.rel (0) target = $region17
    $region16: #{tpu_custom_call.1} parent=1 // pred_region
      %s40 = ssub.s32 512, 512
      %41 = vsyncadd [#allocation6], %s40
      %s42 = sshll.u32 [#allocation7], 4
      %s43 = int_to_ptr.vmem [resolvable:$true] %s42
      %48 = dma.hbm_to_vmem [thread:$0]  %s3, 512, %s43, [#allocation6], 128, 128, 8
    $region17: #{tpu_custom_call.1} parent=1 // pred_fallthru
      _
    // Predicated region
    $region18: #{tpu_custom_call.1} parent=1 // pred_check
      _
    $region19: #{tpu_custom_call.1} parent=1 // pred_check_branch
      %50 = sbr.rel (0) target = $region21
    $region20: #{tpu_custom_call.1} parent=1 // pred_region
      %s52 = ssub.s32 512, 512
      %53 = vsyncadd [#allocation9], %s52
      %s54 = sshll.u32 [#allocation8], 4
      %s55 = int_to_ptr.vmem [resolvable:$true] %s54
      %60 = dma.hbm_to_vmem [thread:$0]  %s4, 512, %s55, [#allocation9], 128, 128, 8
    $region21: #{tpu_custom_call.1} parent=1 // pred_fallthru
      _
    // Predicated region
    $region22: #{tpu_custom_call.1} parent=1 // pred_check
      _
    $region23: #{tpu_custom_call.1} parent=1 // pred_check_branch
      %62 = sbr.rel (0) target = $region25
    $region24: #{tpu_custom_call.1} parent=1 // pred_region
      _
    $region25: #{tpu_custom_call.1} parent=1 // pred_fallthru
      _
    // Predicated region
    $region26: #{tpu_custom_call.1} parent=1 // pred_check
      _
    $region27: #{tpu_custom_call.1} parent=1 // pred_check_branch
      %64 = sbr.rel (0) target = $region29
    $region28: #{tpu_custom_call.1} parent=1 // pred_region
      %65 = dma.done [#allocation3], 32
    $region29: #{tpu_custom_call.1} parent=1 // pred_fallthru
      _
    // Predicated region
    $region30: #{tpu_custom_call.1} parent=1 // pred_check
      _
    $region31: #{tpu_custom_call.1} parent=1 // pred_check_branch
      %67 = sbr.rel (0) target = $region33
    $region32: #{tpu_custom_call.1} parent=1 // pred_region
      %68 = dma.done [#allocation6], 32
    $region33: #{tpu_custom_call.1} parent=1 // pred_fallthru
      _
    // Predicated region
    $region34: #{tpu_custom_call.1} parent=1 // pred_check
      _
    $region35: #{tpu_custom_call.1} parent=1 // pred_check_branch
      %70 = sbr.rel (0) target = $region37
    $region36: #{tpu_custom_call.1} parent=1 // pred_region
      %71 = dma.done [#allocation6], 512
    $region37: #{tpu_custom_call.1} parent=1 // pred_fallthru
      _
    // Predicated region
    $region38: #{tpu_custom_call.1} parent=1 // pred_check
      _
    $region39: #{tpu_custom_call.1} parent=1 // pred_check_branch
      %73 = sbr.rel (0) target = $region41
    $region40: #{tpu_custom_call.1} parent=1 // pred_region
      %74 = dma.done [#allocation9], 512
    $region41: #{tpu_custom_call.1} parent=1 // pred_fallthru
      _
    %v75 = vld [vmem:[#allocation2] sm:$0x3]
    %v76 = vld [vmem:[#allocation5] sm:$0x3]
    %v77 = vld [vmem:[%s2] sm:$0x3]
    %v78 = vld [vmem:[#allocation7] sm:$0xff]
    %v79 = vld [vmem:[#allocation7 + $0x8] sm:$0xff]
    %v80 = vld [vmem:[#allocation7 + $0x10] sm:$0xff]
    %v81 = vld [vmem:[#allocation7 + $0x18] sm:$0xff]
    %v82 = vld [vmem:[%s5] sm:$0x1]
    %v83 = vlaneseq
    %v84 = vshrl.u32 %v83, 7
    %v85 = vsub.s32 0, %v84
    %v86 = vrot.slane %v82, %v85
    %vm87 = vcmask 261120
    %v89 = vsel %vm87, %v75, 0
    %91 = vmatprep.subr.mxu0 0.0
    %92 = vmatpush1.msra.mxu0 0.0
    %93 = vmatprep.subr.mxu0 0.0
    %94 = vmatpush1.msra.mxu0 0.0
    %95 = vmatprep.subr.mxu0 0.0
    %96 = vmatpush1.msra.mxu0 0.0
    %97 = vmatprep.subr.mxu0 0.0
    %98 = vmatpush1.msra.mxu0 0.0
    %99 = vmatprep.subr.mxu0 0.0
    %100 = vmatpush1.msra.mxu0 0.0
    %101 = vmatprep.subr.mxu0 0.0
    %102 = vmatpush1.msra.mxu0 0.0
    %103 = vmatprep.subr.mxu0 0.0
    %104 = vmatpush1.msra.mxu0 0.0
    %105 = vmatprep.subr.mxu0 0.0
    %106 = vmatpush1.msra.mxu0 0.0
    %107 = vmatprep.subr.mxu0 0.0
    %108 = vmatpush1.msra.mxu0 0.0
    %109 = vmatprep.subr.mxu0 0.0
    %110 = vmatpush1.msra.mxu0 0.0
    %111 = vmatprep.subr.mxu0 0.0
    %112 = vmatpush1.msra.mxu0 0.0
    %113 = vmatprep.subr.mxu0 0.0
    %114 = vmatpush1.msra.mxu0 0.0
    %115 = vmatprep.subr.mxu0 0.0
    %116 = vmatpush1.msra.mxu0 %v81
    %117 = vmatprep.subr.mxu0 0.0
    %118 = vmatpush1.msra.mxu0 %v80
    %119 = vmatprep.subr.mxu0 0.0
    %120 = vmatpush1.msra.mxu0 %v79
    %121 = vmatprep.subr.mxu0 0.0
    %122 = vmatpush1.msra.mxu0 %v78
    %123 = vmatprep.subr.mxu0 0.0
    %124 = vmatpush2.msra.mxu0 0.0
    %125 = vmatprep.subr.mxu0 0.0
    %126 = vmatpush2.msra.mxu0 0.0
    %127 = vmatprep.subr.mxu0 0.0
    %128 = vmatpush2.msra.mxu0 0.0
    %129 = vmatprep.subr.mxu0 0.0
    %130 = vmatpush2.msra.mxu0 0.0
    %131 = vmatprep.subr.mxu0 0.0
    %132 = vmatpush2.msra.mxu0 0.0
    %133 = vmatprep.subr.mxu0 0.0
    %134 = vmatpush2.msra.mxu0 0.0
    %135 = vmatprep.subr.mxu0 0.0
    %136 = vmatpush2.msra.mxu0 0.0
    %137 = vmatprep.subr.mxu0 0.0
    %138 = vmatpush2.msra.mxu0 0.0
    %139 = vmatprep.subr.mxu0 0.0
    %140 = vmatpush2.msra.mxu0 0.0
    %141 = vmatprep.subr.mxu0 0.0
    %142 = vmatpush2.msra.mxu0 0.0
    %143 = vmatprep.subr.mxu0 0.0
    %144 = vmatpush2.msra.mxu0 0.0
    %145 = vmatprep.subr.mxu0 0.0
    %146 = vmatpush2.msra.mxu0 0.0
    %147 = vmatprep.subr.mxu0 0.0
    %148 = vmatpush2.msra.mxu0 0.0
    %149 = vmatprep.subr.mxu0 0.0
    %150 = vmatpush2.msra.mxu0 0.0
    %151 = vmatprep.subr.mxu0 0.0
    %152 = vmatpush2.msra.mxu0 0.0
    %153 = vmatprep.subr.mxu0 0.0
    %154 = vmatpush2.msra.mxu0 0.0
    %155 = vmatprep.mubr.f32.mxu0 0.0
    %156 = vmatmul.mubr.f32.gmra.mxu0 %v89
    %v157 = vpop.f32.mrf.mxu0
    %v158 = vadd.f32 %v86, %v157
    %v159 = vpop.f32.mrf.mxu0
    %160 = vdwg.mxu0
    %v161 = vld [vmem:[#allocation8] sm:$0xff]
    %v162 = vld [vmem:[#allocation8 + $0x8] sm:$0xff]
    %v163 = vld [vmem:[#allocation8 + $0x10] sm:$0xff]
    %v164 = vld [vmem:[#allocation8 + $0x18] sm:$0xff]
    %v165 = vld [vmem:[%s5 + $0x1] sm:$0x1]
    %v166 = vlaneseq
    %v167 = vshrl.u32 %v166, 7
    %v168 = vsub.s32 0, %v167
    %v169 = vrot.slane %v165, %v168
    %v171 = vsel %vm87, %v76, 0
    %173 = vmatprep.subr.mxu0 0.0
    %174 = vmatpush1.msra.mxu0 0.0
    %175 = vmatprep.subr.mxu0 0.0
    %176 = vmatpush1.msra.mxu0 0.0
    %177 = vmatprep.subr.mxu0 0.0
    %178 = vmatpush1.msra.mxu0 0.0
    %179 = vmatprep.subr.mxu0 0.0
    %180 = vmatpush1.msra.mxu0 0.0
    %181 = vmatprep.subr.mxu0 0.0
    %182 = vmatpush1.msra.mxu0 0.0
    %183 = vmatprep.subr.mxu0 0.0
    %184 = vmatpush1.msra.mxu0 0.0
    %185 = vmatprep.subr.mxu0 0.0
    %186 = vmatpush1.msra.mxu0 0.0
    %187 = vmatprep.subr.mxu0 0.0
    %188 = vmatpush1.msra.mxu0 0.0
    %189 = vmatprep.subr.mxu0 0.0
    %190 = vmatpush1.msra.mxu0 0.0
    %191 = vmatprep.subr.mxu0 0.0
    %192 = vmatpush1.msra.mxu0 0.0
    %193 = vmatprep.subr.mxu0 0.0
    %194 = vmatpush1.msra.mxu0 0.0
    %195 = vmatprep.subr.mxu0 0.0
    %196 = vmatpush1.msra.mxu0 0.0
    %197 = vmatprep.subr.mxu0 0.0
    %198 = vmatpush1.msra.mxu0 %v164
    %199 = vmatprep.subr.mxu0 0.0
    %200 = vmatpush1.msra.mxu0 %v163
    %201 = vmatprep.subr.mxu0 0.0
    %202 = vmatpush1.msra.mxu0 %v162
    %203 = vmatprep.subr.mxu0 0.0
    %204 = vmatpush1.msra.mxu0 %v161
    %205 = vmatprep.subr.mxu0 0.0
    %206 = vmatpush2.msra.mxu0 0.0
    %207 = vmatprep.subr.mxu0 0.0
    %208 = vmatpush2.msra.mxu0 0.0
    %209 = vmatprep.subr.mxu0 0.0
    %210 = vmatpush2.msra.mxu0 0.0
    %211 = vmatprep.subr.mxu0 0.0
    %212 = vmatpush2.msra.mxu0 0.0
    %213 = vmatprep.subr.mxu0 0.0
    %214 = vmatpush2.msra.mxu0 0.0
    %215 = vmatprep.subr.mxu0 0.0
    %216 = vmatpush2.msra.mxu0 0.0
    %217 = vmatprep.subr.mxu0 0.0
    %218 = vmatpush2.msra.mxu0 0.0
    %219 = vmatprep.subr.mxu0 0.0
    %220 = vmatpush2.msra.mxu0 0.0
    %221 = vmatprep.subr.mxu0 0.0
    %222 = vmatpush2.msra.mxu0 0.0
    %223 = vmatprep.subr.mxu0 0.0
    %224 = vmatpush2.msra.mxu0 0.0
    %225 = vmatprep.subr.mxu0 0.0
    %226 = vmatpush2.msra.mxu0 0.0
    %227 = vmatprep.subr.mxu0 0.0
    %228 = vmatpush2.msra.mxu0 0.0
    %229 = vmatprep.subr.mxu0 0.0
    %230 = vmatpush2.msra.mxu0 0.0
    %231 = vmatprep.subr.mxu0 0.0
    %232 = vmatpush2.msra.mxu0 0.0
    %233 = vmatprep.subr.mxu0 0.0
    %234 = vmatpush2.msra.mxu0 0.0
    %235 = vmatprep.subr.mxu0 0.0
    %236 = vmatpush2.msra.mxu0 0.0
    %237 = vmatprep.mubr.f32.mxu0 0.0
    %238 = vmatmul.mubr.f32.gmra.mxu0 %v171
    %v239 = vpop.f32.mrf.mxu0
    %v240 = vadd.f32 %v169, %v239
    %v241 = vpop.f32.mrf.mxu0
    %242 = vdwg.mxu0
    %v243 = vlaneseq
    %v244 = vshrl.u32 %v243, 7
    %v245 = vsub.s32 0, %v244
    %v246 = vrot.slane %v240, %v245
    %248 = vbcast.lane.b32.xlu0 %v246, 256
    %v249 = vpop.permute.xlu0 %248
    %s251 = sor.u32 256, 8
    %252 = vbcast.lane.b32.xlu0 %v246, %s251
    %v253 = vpop.permute.xlu0 %252
    %s255 = sor.u32 256, 16
    %256 = vbcast.lane.b32.xlu0 %v246, %s255
    %v257 = vpop.permute.xlu0 %256
    %s259 = sor.u32 256, 24
    %260 = vbcast.lane.b32.xlu0 %v246, %s259
    %v261 = vpop.permute.xlu0 %260
    %v262 = vlaneseq
    %v263 = vshrl.u32 %v262, 7
    %v264 = vsub.s32 1, %v263
    %v265 = vrot.slane %v240, %v264
    %267 = vbcast.lane.b32.xlu0 %v265, 256
    %v268 = vpop.permute.xlu0 %267
    %s270 = sor.u32 256, 8
    %271 = vbcast.lane.b32.xlu0 %v265, %s270
    %v272 = vpop.permute.xlu0 %271
    %s274 = sor.u32 256, 16
    %275 = vbcast.lane.b32.xlu0 %v265, %s274
    %v276 = vpop.permute.xlu0 %275
    %s278 = sor.u32 256, 24
    %279 = vbcast.lane.b32.xlu0 %v265, %s278
    %v280 = vpop.permute.xlu0 %279
    %v283 = vunpack.c.l.s4 1966171168
    %v284 = vunpack.c.0.s8 %v283
    %v285 = vlaneseq
    %v286 = vshrl.u32 %v285, 7
    %v287 = vsub.s32 %v284, %v286
    %v288 = vrot.slane %v158, %v287
    %v289 = vcombine.high %v288, %v288
    %v291 = vunpack.c.l.s4 1966171168
    %v292 = vunpack.c.0.s8 %v291
    %v293 = vlaneseq
    %v294 = vshrl.u32 %v293, 7
    %v295 = vsub.s32 %v292, %v294
    %v296 = vrot.slane %v288, %v295
    %v298 = vunpack.c.l.s4 1966171168
    %v299 = vunpack.c.0.s8 %v298
    %v300 = vlaneseq
    %v301 = vshrl.u32 %v300, 7
    %v302 = vsub.s32 %v299, %v301
    %v303 = vrot.slane %v289, %v302
    %v304 = vlaneseq
    %v305 = vshrl.u32 %v304, 7
    %v306 = vsub.s32 0, %v305
    %v307 = vrot.slane %v296, %v306
    %v308 = vlaneseq
    %v309 = vshrl.u32 %v308, 7
    %v310 = vsub.s32 0, %v309
    %v311 = vrot.slane %v303, %v310
    %v314 = vmul.f32 %v249, %v307
    %v315 = vmul.f32 %v253, %v307
    %v316 = vmul.f32 %v257, %v307
    %v317 = vmul.f32 %v261, %v307
    %v318 = vmul.f32 %v268, %v311
    %v319 = vmul.f32 %v272, %v311
    %v320 = vmul.f32 %v276, %v311
    %v321 = vmul.f32 %v280, %v311
    %v322 = vsel %vm87, %v314, -inf
    %323 = vmax.xlane.f32.xlu0 %v322
    %v324 = vpop.xlane.xlu0 %323
    %v325 = vsel %vm87, %v315, -inf
    %326 = vmax.xlane.f32.xlu0 %v325
    %v327 = vpop.xlane.xlu0 %326
    %v328 = vsel %vm87, %v316, -inf
    %329 = vmax.xlane.f32.xlu0 %v328
    %v330 = vpop.xlane.xlu0 %329
    %v331 = vsel %vm87, %v317, -inf
    %332 = vmax.xlane.f32.xlu0 %v331
    %v333 = vpop.xlane.xlu0 %332
    %v334 = vsel %vm87, %v318, -inf
    %335 = vmax.xlane.f32.xlu0 %v334
    %v336 = vpop.xlane.xlu0 %335
    %v337 = vsel %vm87, %v319, -inf
    %338 = vmax.xlane.f32.xlu0 %v337
    %v339 = vpop.xlane.xlu0 %338
    %v340 = vsel %vm87, %v320, -inf
    %341 = vmax.xlane.f32.xlu0 %v340
    %v342 = vpop.xlane.xlu0 %341
    %v343 = vsel %vm87, %v321, -inf
    %344 = vmax.xlane.f32.xlu0 %v343
    %v345 = vpop.xlane.xlu0 %344
    %v346 = vsub.f32 %v314, %v324
    %v347 = vsub.f32 %v315, %v327
    %v348 = vsub.f32 %v316, %v330
    %v349 = vsub.f32 %v317, %v333
    %v350 = vsub.f32 %v318, %v336
    %v351 = vsub.f32 %v319, %v339
    %v352 = vsub.f32 %v320, %v342
    %v353 = vsub.f32 %v321, %v345
    %v354 = vmul.f32 %v346, 1.442695
    %v355 = vpow.pop %v354
    %v356 = vmul.f32 %v347, 1.442695
    %v357 = vpow.pop %v356
    %v358 = vmul.f32 %v348, 1.442695
    %v359 = vpow.pop %v358
    %v360 = vmul.f32 %v349, 1.442695
    %v361 = vpow.pop %v360
    %v362 = vmul.f32 %v350, 1.442695
    %v363 = vpow.pop %v362
    %v364 = vmul.f32 %v351, 1.442695
    %v365 = vpow.pop %v364
    %v366 = vmul.f32 %v352, 1.442695
    %v367 = vpow.pop %v366
    %v368 = vmul.f32 %v353, 1.442695
    %v369 = vpow.pop %v368
    %v370 = vsel %vm87, %v355, 0.0
    %371 = vadd.xlane.f32.xlu0 %v370
    %v372 = vpop.xlane.xlu0 %371
    %v373 = vsel %vm87, %v357, 0.0
    %374 = vadd.xlane.f32.xlu0 %v373
    %v375 = vpop.xlane.xlu0 %374
    %v376 = vsel %vm87, %v359, 0.0
    %377 = vadd.xlane.f32.xlu0 %v376
    %v378 = vpop.xlane.xlu0 %377
    %v379 = vsel %vm87, %v361, 0.0
    %380 = vadd.xlane.f32.xlu0 %v379
    %v381 = vpop.xlane.xlu0 %380
    %v382 = vsel %vm87, %v363, 0.0
    %383 = vadd.xlane.f32.xlu0 %v382
    %v384 = vpop.xlane.xlu0 %383
    %v385 = vsel %vm87, %v365, 0.0
    %386 = vadd.xlane.f32.xlu0 %v385
    %v387 = vpop.xlane.xlu0 %386
    %v388 = vsel %vm87, %v367, 0.0
    %389 = vadd.xlane.f32.xlu0 %v388
    %v390 = vpop.xlane.xlu0 %389
    %v391 = vsel %vm87, %v369, 0.0
    %392 = vadd.xlane.f32.xlu0 %v391
    %v393 = vpop.xlane.xlu0 %392
    %v394 = vrcp.pop %v372
    %v395 = vrcp.pop %v375
    %v396 = vrcp.pop %v378
    %v397 = vrcp.pop %v381
    %v398 = vrcp.pop %v384
    %v399 = vrcp.pop %v387
    %v400 = vrcp.pop %v390
    %v401 = vrcp.pop %v393
    %v402 = vmul.f32 %v355, %v394
    %v403 = vmul.f32 %v357, %v395
    %v404 = vmul.f32 %v359, %v396
    %v405 = vmul.f32 %v361, %v397
    %v406 = vmul.f32 %v363, %v398
    %v407 = vmul.f32 %v365, %v399
    %v408 = vmul.f32 %v367, %v400
    %v409 = vmul.f32 %v369, %v401
    %v410 = vlaneseq
    %v411 = vshrl.u32 %v410, 7
    %v412 = vsub.s32 0, %v411
    %v413 = vrot.slane %v77, %v412
    %415 = vbcast.lane.b32.xlu0 %v413, 256
    %v416 = vpop.permute.xlu0 %415
    %s418 = sor.u32 256, 8
    %419 = vbcast.lane.b32.xlu0 %v413, %s418
    %v420 = vpop.permute.xlu0 %419
    %s422 = sor.u32 256, 16
    %423 = vbcast.lane.b32.xlu0 %v413, %s422
    %v424 = vpop.permute.xlu0 %423
    %s426 = sor.u32 256, 24
    %427 = vbcast.lane.b32.xlu0 %v413, %s426
    %v428 = vpop.permute.xlu0 %427
    %v429 = vlaneseq
    %v430 = vshrl.u32 %v429, 7
    %v431 = vsub.s32 1, %v430
    %v432 = vrot.slane %v77, %v431
    %434 = vbcast.lane.b32.xlu0 %v432, 256
    %v435 = vpop.permute.xlu0 %434
    %s437 = sor.u32 256, 8
    %438 = vbcast.lane.b32.xlu0 %v432, %s437
    %v439 = vpop.permute.xlu0 %438
    %s441 = sor.u32 256, 16
    %442 = vbcast.lane.b32.xlu0 %v432, %s441
    %v443 = vpop.permute.xlu0 %442
    %s445 = sor.u32 256, 24
    %446 = vbcast.lane.b32.xlu0 %v432, %s445
    %v447 = vpop.permute.xlu0 %446
    %v448 = vmul.f32 %v402, %v416
    %v449 = vmul.f32 %v403, %v420
    %v450 = vmul.f32 %v404, %v424
    %v451 = vmul.f32 %v405, %v428
    %v452 = vmul.f32 %v406, %v435
    %v453 = vmul.f32 %v407, %v439
    %v454 = vmul.f32 %v408, %v443
    %v455 = vmul.f32 %v409, %v447
    %v456 = vsel %vm87, %v448, 0.0
    %v457 = vsel %vm87, %v449, 0.0
    %v458 = vadd.f32 %v456, %v457
    %v459 = vsel %vm87, %v450, 0.0
    %v460 = vadd.f32 %v458, %v459
    %v461 = vsel %vm87, %v451, 0.0
    %v462 = vadd.f32 %v460, %v461
    %v463 = vrot.slane %v462, 4
    %v464 = vadd.f32 %v462, %v463
    %v465 = vrot.slane %v464, 2
    %v466 = vadd.f32 %v464, %v465
    %v467 = vrot.slane %v466, 1
    %v468 = vadd.f32 %v466, %v467
    %v469 = vsel %vm87, %v452, 0.0
    %v470 = vsel %vm87, %v453, 0.0
    %v471 = vadd.f32 %v469, %v470
    %v472 = vsel %vm87, %v454, 0.0
    %v473 = vadd.f32 %v471, %v472
    %v474 = vsel %vm87, %v455, 0.0
    %v475 = vadd.f32 %v473, %v474
    %v476 = vrot.slane %v475, 4
    %v477 = vadd.f32 %v475, %v476
    %v478 = vrot.slane %v477, 2
    %v479 = vadd.f32 %v477, %v478
    %v480 = vrot.slane %v479, 1
    %v481 = vadd.f32 %v479, %v480
    %vm484 = vcmask 1041409
    %v485 = vsel %vm484, %v481, %v468
    %vm487 = vcmask 254976
    %488 = vst.msk [vmem:[#allocation10] sm:$0x3] %vm487, %v485
    // Predicated region
    $region42: #{tpu_custom_call.1} parent=1 // pred_check
      _
    $region43: #{tpu_custom_call.1} parent=1 // pred_check_branch
      %490 = sbr.rel (0) target = $region45
    $region44: #{tpu_custom_call.1} parent=1 // pred_region
      %s492 = ssub.s32 32, 32
      %493 = vsyncadd [#allocation4], %s492
      %s495 = sshll.u32 [#allocation10], 4
      %s496 = int_to_ptr.vmem [resolvable:$true] %s495
      %498 = dma.vmem_to_hbm [thread:$0]  %s496, 32, %s6, [#allocation4]
    $region45: #{tpu_custom_call.1} parent=1 // pred_fallthru
      _
    // Predicated region
    $region46: #{tpu_custom_call.1} parent=1 // pred_check
      _
    $region47: #{tpu_custom_call.1} parent=1 // pred_check_branch
      %500 = sbr.rel (0) target = $region49
    $region48: #{tpu_custom_call.1} parent=1 // pred_region
      %501 = dma.done [#allocation4], 32
    $region49: #{tpu_custom_call.1} parent=1 // pred_fallthru
      _
    %502 = vsyncpa [#allocation3], 1
    %503 = vsyncpa [#allocation6], 1
    %504 = vsyncpa [#allocation9], 1
    %505 = vsyncpa [#allocation4], 1

</llo_original>
